<compile_context>
chip_gen: v5e
topology: v5e:2x2
jax: 0.10.0
libtpu: 0.0.40
codegen_flags: <defaults>
</compile_context>

<pallas_src>
import jax
import jax.numpy as jnp
import numpy as np
from jax.experimental import pallas as pl
from jax.experimental.pallas import tpu as pltpu


# ----------------------------- kernels -------------------------------------
# Argument order: activations..., params..., outputs...
# Storage dtype may be bf16; all epilogue math is f32.

def _res_kernel(h_ref, x_ref, w_ref, b_ref, o_ref):
    # o = h + (x @ W + b)
    xt = jnp.dot(x_ref[...], w_ref[...], preferred_element_type=jnp.float32)
    o_ref[...] = (h_ref[...].astype(jnp.float32) + xt
                  + b_ref[...].astype(jnp.float32)).astype(o_ref.dtype)


def _res_pair_kernel(h_ref, x_ref, h2_ref, x2_ref, w_ref, b_ref, o_ref, o2_ref):
    w = w_ref[...]
    b = b_ref[...].astype(jnp.float32)
    xt = jnp.dot(x_ref[...], w, preferred_element_type=jnp.float32) + b
    xt2 = jnp.dot(x2_ref[...], w, preferred_element_type=jnp.float32) + b
    o_ref[...] = (h_ref[...].astype(jnp.float32) + xt).astype(o_ref.dtype)
    o2_ref[...] = (h2_ref[...].astype(jnp.float32) + xt2).astype(o2_ref.dtype)


def _dense_kernel(h_ref, x_ref, w_ref, b_ref, o_ref):
    # o = concat([h, x @ W + b], -1) via two lane-aligned slice stores
    ch = h_ref.shape[1]
    xt = (jnp.dot(x_ref[...], w_ref[...], preferred_element_type=jnp.float32)
          + b_ref[...].astype(jnp.float32))
    o_ref[:, :ch] = h_ref[...]                 # pass-through store (same dtype)
    o_ref[:, ch:] = xt.astype(o_ref.dtype)


def _dense_pair_kernel(h_ref, x_ref, h2_ref, x2_ref, w_ref, b_ref,
                       o_ref, o2_ref):
    ch = h_ref.shape[1]
    w = w_ref[...]
    b = b_ref[...].astype(jnp.float32)
    xt = jnp.dot(x_ref[...], w, preferred_element_type=jnp.float32) + b
    xt2 = jnp.dot(x2_ref[...], w, preferred_element_type=jnp.float32) + b
    o_ref[:, :ch] = h_ref[...]
    o_ref[:, ch:] = xt.astype(o_ref.dtype)
    o2_ref[:, :ch] = h2_ref[...]
    o2_ref[:, ch:] = xt2.astype(o2_ref.dtype)


def _highway_kernel(h_ref, x_ref, w_ref, b_ref, wg_ref, bg_ref, o_ref):
    # xt = x@W+b ; g = sigmoid(xt@Wg+bg) ; o = xt + g*(h - xt)
    xt = (jnp.dot(x_ref[...], w_ref[...], preferred_element_type=jnp.float32)
          + b_ref[...].astype(jnp.float32))
    g = jax.nn.sigmoid(
        jnp.dot(xt.astype(wg_ref.dtype), wg_ref[...],
                preferred_element_type=jnp.float32)
        + bg_ref[...].astype(jnp.float32))
    o_ref[...] = (xt + g * (h_ref[...].astype(jnp.float32) - xt)).astype(o_ref.dtype)


def _highway_pair_kernel(h_ref, x_ref, h2_ref, x2_ref, w_ref, b_ref,
                         wg_ref, bg_ref, o_ref, o2_ref):
    # PyTorch parity quirk: the gate for BOTH pairs is computed from the FIRST
    # pair's transformed x and reused for the second pair.
    w = w_ref[...]
    b = b_ref[...].astype(jnp.float32)
    xt = jnp.dot(x_ref[...], w, preferred_element_type=jnp.float32) + b
    xt2 = jnp.dot(x2_ref[...], w, preferred_element_type=jnp.float32) + b
    g = jax.nn.sigmoid(
        jnp.dot(xt.astype(wg_ref.dtype), wg_ref[...],
                preferred_element_type=jnp.float32)
        + bg_ref[...].astype(jnp.float32))
    o_ref[...] = (xt + g * (h_ref[...].astype(jnp.float32) - xt)).astype(o_ref.dtype)
    o2_ref[...] = (xt2 + g * (h2_ref[...].astype(jnp.float32) - xt2)).astype(o2_ref.dtype)


def _highway_id_kernel(h_ref, x_ref, wg_ref, bg_ref, o_ref):
    # Identity transformer: skip the transformer matmul entirely.
    x = x_ref[...]
    xf = x.astype(jnp.float32)
    g = jax.nn.sigmoid(
        jnp.dot(x.astype(wg_ref.dtype), wg_ref[...],
                preferred_element_type=jnp.float32)
        + bg_ref[...].astype(jnp.float32))
    o_ref[...] = (xf + g * (h_ref[...].astype(jnp.float32) - xf)).astype(o_ref.dtype)


def _highway_id_pair_kernel(h_ref, x_ref, h2_ref, x2_ref, wg_ref, bg_ref,
                            o_ref, o2_ref):
    x = x_ref[...]
    xf = x.astype(jnp.float32)
    xf2 = x2_ref[...].astype(jnp.float32)
    g = jax.nn.sigmoid(
        jnp.dot(x.astype(wg_ref.dtype), wg_ref[...],
                preferred_element_type=jnp.float32)
        + bg_ref[...].astype(jnp.float32))
    o_ref[...] = (xf + g * (h_ref[...].astype(jnp.float32) - xf)).astype(o_ref.dtype)
    o2_ref[...] = (xf2 + g * (h2_ref[...].astype(jnp.float32) - xf2)).astype(o2_ref.dtype)


# ------------------------- pallas_call wrapper ------------------------------

_TARGET_TILE_M = 1024      # 512-1024 row tiles hit ~85%+ of HBM roofline
_MIN_GRID_STEPS = 4        # >=2 steps per TensorCore on v7x megacore

_VMEM_BUDGETS = None       # (vmem_limit_bytes, tile_budget_bytes)
_BUFFERED_ONE = None       # whether pipeline_mode=pl.Buffered(1) lowers here


def _vmem_budgets():
    """Generation-aware VMEM budgets (v5e/v6e: 128 MiB, v7x: 64 MiB per TC)."""
    global _VMEM_BUDGETS
    if _VMEM_BUDGETS is None:
        try:
            cap = int(pltpu.get_tpu_info().vmem_capacity_bytes)
            _VMEM_BUDGETS = (int(cap * 0.75), int(cap * 0.55))
        except Exception:
            # Conservative fallback that is safe on every generation.
            _VMEM_BUDGETS = (32 * 1024 * 1024, 20 * 1024 * 1024)
    return _VMEM_BUDGETS


def _probe_buffered_one():
    """One-time check that pipeline_mode=pl.Buffered(1) compiles & is correct."""
    def k(w_ref, x_ref, o_ref):
        o_ref[...] = x_ref[...] + w_ref[...]
    try:
        w = jnp.ones((8, 128), jnp.float32)
        x = jnp.ones((16, 128), jnp.float32)
        out = pl.pallas_call(
            k,
            out_shape=jax.ShapeDtypeStruct((16, 128), jnp.float32),
            grid=(2,),
            in_specs=[pl.BlockSpec((8, 128), lambda i: (0, 0),
                                   pipeline_mode=pl.Buffered(1)),
                      pl.BlockSpec((8, 128), lambda i: (i, 0))],
            out_specs=pl.BlockSpec((8, 128), lambda i: (i, 0)),
        )(w, x)
        jax.block_until_ready(out)
        return bool(np.allclose(np.asarray(out), 2.0))
    except Exception:
        return False


def _resident_pipeline_mode():
    global _BUFFERED_ONE
    if _BUFFERED_ONE is None:
        _BUFFERED_ONE = _probe_buffered_one()
    return pl.Buffered(1) if _BUFFERED_ONE else None


def _pick_tile_m(M, per_row_bytes, resident_bytes, tile_budget):
    """Largest M-tile (multiple of 16) that keeps double-buffered activation
    tiles + resident weights under the VMEM budget and leaves >=4 grid steps."""
    avail = max(tile_budget - resident_bytes, 1 << 20)
    cap = max(16, avail // (2 * max(per_row_bytes, 1)))   # 2x act double-buffering
    t = min(_TARGET_TILE_M, M, int(cap))
    if M >= _MIN_GRID_STEPS * 128:
        t = min(t, pl.cdiv(M, _MIN_GRID_STEPS))           # steps for megacore/pipeline
    t = max(16, (t // 16) * 16)                           # bf16 sublane packing
    if t >= M:
        return M     # one full block (exempt from the (8,128) rule)
    return t


def _act_spec(tile_m, c):
    return pl.BlockSpec((tile_m, c), lambda i: (i, 0))


def _resident_spec(shape, pipeline_mode):
    nd = len(shape)
    idx = lambda i: (0,) * nd
    if pipeline_mode is None:
        return pl.BlockSpec(shape, idx)
    return pl.BlockSpec(shape, idx, pipeline_mode=pipeline_mode)


def _skip_call(kernel, acts, params, out_shapes, flops=0, transcendentals=0,
               input_output_aliases=None):
    M = acts[0].shape[0]
    vmem_limit, tile_budget = _vmem_budgets()
    resident_mode = _resident_pipeline_mode()
    res_mult = 1 if resident_mode is not None else 2      # single vs double buffer

    per_row = sum(a.shape[1] * a.dtype.itemsize for a in acts)
    per_row += sum(s.shape[1] * np.dtype(s.dtype).itemsize for s in out_shapes)
    resident = int(sum(p.size * p.dtype.itemsize for p in params))
    tile_m = _pick_tile_m(M, per_row, res_mult * resident, tile_budget)
    grid = (pl.cdiv(M, tile_m),)                          # ragged tail handled by Pallas

    in_specs = ([_act_spec(tile_m, a.shape[1]) for a in acts] +
                [_resident_spec(p.shape, resident_mode) for p in params])
    out_specs_list = [_act_spec(tile_m, s.shape[1]) for s in out_shapes]

    single_out = len(out_shapes) == 1
    out_shape = out_shapes[0] if single_out else tuple(out_shapes)
    out_specs = out_specs_list[0] if single_out else tuple(out_specs_list)

    bytes_accessed = int(
        sum(a.size * a.dtype.itemsize for a in acts) + resident +
        sum(int(np.prod(s.shape)) * np.dtype(s.dtype).itemsize
            for s in out_shapes))

    return pl.pallas_call(
        kernel,
        out_shape=out_shape,
        grid=grid,
        in_specs=in_specs,
        out_specs=out_specs,
        input_output_aliases=input_output_aliases or {},
        compiler_params=pltpu.CompilerParams(
            dimension_semantics=("parallel",),
            vmem_limit_bytes=vmem_limit),
        cost_estimate=pl.CostEstimate(
            flops=int(flops),
            transcendentals=int(transcendentals),
            bytes_accessed=bytes_accessed),
    )(*acts, *params)


# --------------------------- module wrapper ---------------------------------

def _torch_linear_init(key, fan_in, fan_out, dtype):
    # nn.Linear default init: U(-1/sqrt(fan_in), 1/sqrt(fan_in)).
    kw, kb = jax.random.split(key)
    bound = 1.0 / np.sqrt(fan_in)
    w = jax.random.uniform(kw, (fan_in, fan_out), jnp.float32, -bound, bound)
    b = jax.random.uniform(kb, (1, fan_out), jnp.float32, -bound, bound)
    return w.astype(dtype), b.astype(dtype)   # [in, out], [1, out]


class SkipConnection:
    def __init__(self, skip_connection, in_channels, out_channels,
                 key=None, dtype=jnp.float32, alias_h=False):
        if key is None:
            key = jax.random.PRNGKey(0)
        self.skip_connection = skip_connection
        self.in_channels = in_channels
        self.out_channels = out_channels
        self.dtype = dtype
        # alias_h=True aliases the h input buffer to the output (res/highway).
        # Only realizes a saving when the caller donates h (e.g. under jit);
        # h must not be reused after the call in that case.
        self.alias_h = alias_h
        self.identity = (in_channels == out_channels)
        k_t, k_g = jax.random.split(key)
        if self.identity:
            self.w, self.b = None, None      # Identity: no weight, no matmul
        else:
            self.w, self.b = _torch_linear_init(k_t, in_channels, out_channels, dtype)
        if skip_connection == 'highway':
            self.wg, self.bg = _torch_linear_init(k_g, out_channels, out_channels, dtype)

    # ---- single (h, x) tuple path --------------------------------------
    def _single(self, h, x):
        mode = self.skip_connection
        if mode == 'vanilla':
            return h
        M = h.shape[0]
        cin, cout = self.in_channels, self.out_channels
        alias = {0: 0} if self.alias_h else None
        if mode == 'res':
            if self.identity:
                return h + x     # pure VPU add: no matmul, no weight DMA
            out = jax.ShapeDtypeStruct(h.shape, h.dtype)
            return _skip_call(_res_kernel, (h, x), (self.w, self.b), (out,),
                              flops=2 * M * cin * cout + 2 * h.size,
                              input_output_aliases=alias)
        if mode == 'dense':
            if self.identity:
                return jnp.concatenate([h, x], axis=-1)   # pure copy; XLA is fine
            out = jax.ShapeDtypeStruct((M, h.shape[1] + cout), h.dtype)
            return _skip_call(_dense_kernel, (h, x), (self.w, self.b), (out,),
                              flops=2 * M * cin * cout)
        if mode == 'highway':
            out = jax.ShapeDtypeStruct(h.shape, h.dtype)
            gate_flops = 2 * M * cout * cout
            if self.identity:
                return _skip_call(_highway_id_kernel, (h, x),
                                  (self.wg, self.bg), (out,),
                                  flops=gate_flops + 3 * h.size,
                                  transcendentals=M * cout,
                                  input_output_aliases=alias)
            return _skip_call(_highway_kernel, (h, x),
                              (self.w, self.b, self.wg, self.bg), (out,),
                              flops=2 * M * cin * cout + gate_flops + 3 * h.size,
                              transcendentals=M * cout,
                              input_output_aliases=alias)
        raise ValueError(mode)

    # ---- fused list-of-pairs path (one pallas_call for both pairs) -----
    def _pair(self, h, x, h2, x2):
        mode = self.skip_connection
        if mode == 'vanilla':
            return (h, h2)
        M = h.shape[0]
        cin, cout = self.in_channels, self.out_channels
        alias = {0: 0, 2: 1} if self.alias_h else None
        out = jax.ShapeDtypeStruct(h.shape, h.dtype)
        out2 = jax.ShapeDtypeStruct(h2.shape, h2.dtype)
        if mode == 'res':
            if self.identity:
                return (h + x, h2 + x2)
            return _skip_call(_res_pair_kernel, (h, x, h2, x2),
                              (self.w, self.b), (out, out2),
                              flops=4 * M * cin * cout + 2 * (h.size + h2.size),
                              input_output_aliases=alias)
        if mode == 'dense':
            if self.identity:
                return (jnp.concatenate([h, x], axis=-1),
                        jnp.concatenate([h2, x2], axis=-1))
            out = jax.ShapeDtypeStruct((M, h.shape[1] + cout), h.dtype)
            out2 = jax.ShapeDtypeStruct((M, h2.shape[1] + cout), h2.dtype)
            return _skip_call(_dense_pair_kernel, (h, x, h2, x2),
                              (self.w, self.b), (out, out2),
                              flops=4 * M * cin * cout)
        if mode == 'highway':
            gate_flops = 2 * M * cout * cout   # gate computed once (from first pair)
            if self.identity:
                return _skip_call(_highway_id_pair_kernel, (h, x, h2, x2),
                                  (self.wg, self.bg), (out, out2),
                                  flops=gate_flops + 3 * (h.size + h2.size),
                                  transcendentals=M * cout,
                                  input_output_aliases=alias)
            return _skip_call(_highway_pair_kernel, (h, x, h2, x2),
                              (self.w, self.b, self.wg, self.bg), (out, out2),
                              flops=4 * M * cin * cout + gate_flops
                                    + 3 * (h.size + h2.size),
                              transcendentals=M * cout,
                              input_output_aliases=alias)
        raise ValueError(mode)

    def __call__(self, h_x):
        if isinstance(h_x, list):
            (h, x), (h2, x2) = h_x[0], h_x[1]
            return self._pair(h, x, h2, x2)
        h, x = h_x
        return self._single(h, x)


# ------------------------------- reference ----------------------------------
# Mirrors the kernels' dtype handling (f32 math, storage-dtype matmul inputs).

def _ref_transform(x, w, b, identity):
    if identity:
        return x.astype(jnp.float32)
    return (jnp.dot(x, w, preferred_element_type=jnp.float32)
            + b.astype(jnp.float32))


def _ref_gate(xt, wg, bg):
    return jax.nn.sigmoid(
        jnp.dot(xt.astype(wg.dtype), wg, preferred_element_type=jnp.float32)
        + bg.astype(jnp.float32))


def _ref_single(mode, h, x, w, b, wg=None, bg=None, identity=False):
    if mode == 'vanilla':
        return h
    xt = _ref_transform(x, w, b, identity)
    hf = h.astype(jnp.float32)
    if mode == 'res':
        return (hf + xt).astype(h.dtype)
    if mode == 'dense':
        return jnp.concatenate([hf, xt], axis=-1).astype(h.dtype)
    if mode == 'highway':
        g = _ref_gate(xt, wg, bg)
        return (hf * g + xt * (1.0 - g)).astype(h.dtype)
    raise ValueError(mode)


def _ref_pair(mode, h, x, h2, x2, w, b, wg=None, bg=None, identity=False):
    if mode == 'vanilla':
        return (h, h2)
    xt = _ref_transform(x, w, b, identity)
    xt2 = _ref_transform(x2, w, b, identity)
    hf, hf2 = h.astype(jnp.float32), h2.astype(jnp.float32)
    if mode == 'res':
        return ((hf + xt).astype(h.dtype), (hf2 + xt2).astype(h2.dtype))
    if mode == 'dense':
        return (jnp.concatenate([hf, xt], axis=-1).astype(h.dtype),
                jnp.concatenate([hf2, xt2], axis=-1).astype(h2.dtype))
    if mode == 'highway':
        g = _ref_gate(xt, wg, bg)          # PyTorch quirk: gate from FIRST pair
        return ((hf * g + xt * (1.0 - g)).astype(h.dtype),
                (hf2 * g + xt2 * (1.0 - g)).astype(h2.dtype))
    raise ValueError(mode)


def _check(out, ref, rtol, atol):
    np.testing.assert_allclose(
        np.asarray(jnp.asarray(out, jnp.float32)),
        np.asarray(jnp.asarray(ref, jnp.float32)),
        rtol=rtol, atol=atol)


# --------------------------------- main --------------------------------------

if __name__ == "__main__":
    key = jax.random.PRNGKey(0)

    # (cin, cout, M): lane-dense channel counts; M=600 exercises the ragged
    # cdiv grid tail, M=512 the evenly-divided multi-step grid.
    test_cases = [
        (128, 256, 600),   # Linear transformer path (ragged M)
        (256, 256, 512),   # Identity transformer path (no eye() matmul)
    ]

    # f32 for exact PyTorch parity; bf16 storage (2x less HBM traffic, native
    # MXU dtype on v6e/v7x) with a correspondingly looser tolerance.
    for dtype, rtol, atol in ((jnp.float32, 3e-5, 3e-5),
                              (jnp.bfloat16, 2e-2, 2e-2)):
        for (cin, cout, M) in test_cases:
            kh, kx, kh2, kx2, kp, key = jax.random.split(key, 6)
            h = jax.random.normal(kh, (M, cout), jnp.float32).astype(dtype)
            x = jax.random.normal(kx, (M, cin), jnp.float32).astype(dtype)
            h2 = jax.random.normal(kh2, (M, cout), jnp.float32).astype(dtype)
            x2 = jax.random.normal(kx2, (M, cin), jnp.float32).astype(dtype)

            for mode in ('vanilla', 'res', 'dense', 'highway'):
                mod = SkipConnection(mode, cin, cout, key=kp, dtype=dtype)
                identity = mod.identity
                w, b = mod.w, mod.b
                wg = getattr(mod, 'wg', None)
                bg = getattr(mod, 'bg', None)

                # single (h, x) path
                out = jax.block_until_ready(mod((h, x)))
                ref = _ref_single(mode, h, x, w, b, wg, bg, identity)
                _check(out, ref, rtol, atol)

                # fused list-of-pairs path
                outs = jax.block_until_ready(mod([(h, x), (h2, x2)]))
                refs = _ref_pair(mode, h, x, h2, x2, w, b, wg, bg, identity)
                for o, r in zip(outs, refs):
                    _check(o, r, rtol, atol)

    # input_output_aliases path (h aliased to the output); reference is
    # materialized BEFORE the call and h_a is not reused afterwards.
    kh, kx, kp, key = jax.random.split(key, 4)
    Ma, cin_a, cout_a = 512, 128, 256
    h_a = jax.random.normal(kh, (Ma, cout_a), jnp.float32)
    x_a = jax.random.normal(kx, (Ma, cin_a), jnp.float32)
    mod_a = SkipConnection('res', cin_a, cout_a, key=kp, alias_h=True)
    ref_a = np.asarray(_ref_single('res', h_a, x_a, mod_a.w, mod_a.b,
                                   identity=False))
    out_a = jax.block_until_ready(mod_a((h_a, x_a)))
    np.testing.assert_allclose(np.asarray(out_a), ref_a, rtol=3e-5, atol=3e-5)

    print("KERNEL_OK")
</pallas_src>

<mosaic_0001>
module attributes {stable_mosaic.version = 11 : i64} {
  func.func @k(%arg0: i32, %arg1: memref<8x128xf32, #tpu.memory_space<vmem>>, %arg2: memref<8x128xf32, #tpu.memory_space<vmem>>, %arg3: memref<8x128xf32, #tpu.memory_space<vmem>>) attributes {dimension_semantics = [#tpu.dimension_semantics<arbitrary>], iteration_bounds = array<i64: 2>, scalar_prefetch = 0 : i64, scratch_operands = 0 : i64, tpu.core_type = #tpu.core_type<tc>, window_params = [{pipeline_mode = #tpu.pipeline_mode<synchronous>, transform_indices = @transform_0, window_bounds = array<i64: 8, 128>}, {transform_indices = @transform_1, window_bounds = array<i64: 8, 128>}, {transform_indices = @transform_2, window_bounds = array<i64: 8, 128>}]} {
    %c0 = arith.constant 0 : index
    %c0_0 = arith.constant 0 : index
    %0 = vector.load %arg2[%c0, %c0_0] : memref<8x128xf32, #tpu.memory_space<vmem>>, vector<8x128xf32>
    %c0_1 = arith.constant 0 : index
    %c0_2 = arith.constant 0 : index
    %1 = vector.load %arg1[%c0_1, %c0_2] : memref<8x128xf32, #tpu.memory_space<vmem>>, vector<8x128xf32>
    %2 = arith.addf %0, %1 : vector<8x128xf32>
    %c0_3 = arith.constant 0 : index
    %c0_4 = arith.constant 0 : index
    %3 = vector.load %arg3[%c0_3, %c0_4] : memref<8x128xf32, #tpu.memory_space<vmem>>, vector<8x128xf32>
    tpu.vector_store %arg3[%c0_3, %c0_4], %2 {strides = array<i32>} : memref<8x128xf32, #tpu.memory_space<vmem>>, vector<8x128xf32>,
    return
  }
  func.func @transform_0(%arg0: i32) -> (i32, i32) {
    %c0_i32 = arith.constant 0 : i32
    %c0_i32_0 = arith.constant 0 : i32
    %c0_i32_1 = arith.constant 0 : i32
    return %c0_i32, %c0_i32_0 : i32, i32
  }
  func.func @transform_1(%arg0: i32) -> (i32, i32) {
    %c0_i32 = arith.constant 0 : i32
    %c0_i32_0 = arith.constant 0 : i32
    return %arg0, %c0_i32 : i32, i32
  }
  func.func @transform_2(%arg0: i32) -> (i32, i32) {
    %c0_i32 = arith.constant 0 : i32
    %c0_i32_0 = arith.constant 0 : i32
    return %arg0, %c0_i32 : i32, i32
  }
}

module attributes {stable_mosaic.version = 11 : i64} {
  func.func @_res_kernel(%arg0: i32, %arg1: memref<144x256xf32, #tpu.memory_space<vmem>>, %arg2: memref<144x128xf32, #tpu.memory_space<vmem>>, %arg3: memref<128x256xf32, #tpu.memory_space<vmem>>, %arg4: memref<1x256xf32, #tpu.memory_space<vmem>>, %arg5: memref<144x256xf32, #tpu.memory_space<vmem>>) attributes {dimension_semantics = [#tpu.dimension_semantics<parallel>], iteration_bounds = array<i64: 5>, scalar_prefetch = 0 : i64, scratch_operands = 0 : i64, tpu.core_type = #tpu.core_type<tc>, window_params = [{transform_indices = @transform_0, window_bounds = array<i64: 144, 256>}, {transform_indices = @transform_1, window_bounds = array<i64: 144, 128>}, {pipeline_mode = #tpu.pipeline_mode<synchronous>, transform_indices = @transform_2, window_bounds = array<i64: 128, 256>}, {pipeline_mode = #tpu.pipeline_mode<synchronous>, transform_indices = @transform_3, window_bounds = array<i64: 1, 256>}, {transform_indices = @transform_4, window_bounds = array<i64: 144, 256>}]} {
    %c0 = arith.constant 0 : index
    %c0_0 = arith.constant 0 : index
    %0 = vector.load %arg2[%c0, %c0_0] : memref<144x128xf32, #tpu.memory_space<vmem>>, vector<144x128xf32>
    %c0_1 = arith.constant 0 : index
    %c0_2 = arith.constant 0 : index
    %1 = vector.load %arg3[%c0_1, %c0_2] : memref<128x256xf32, #tpu.memory_space<vmem>>, vector<128x256xf32>
    %cst = arith.constant dense<0.000000e+00> : vector<144x256xf32>
    %2 = tpu.matmul %0, %1, %cst {dimension_numbers = #tpu.dot_dimension_numbers<[1], [0], [0], [1], [0, 0, 1, 1], [], []>} : vector<144x128xf32>, vector<128x256xf32>, vector<144x256xf32> -> vector<144x256xf32>
    %c0_3 = arith.constant 0 : index
    %c0_4 = arith.constant 0 : index
    %3 = vector.load %arg1[%c0_3, %c0_4] : memref<144x256xf32, #tpu.memory_space<vmem>>, vector<144x256xf32>
    %4 = arith.addf %3, %2 : vector<144x256xf32>
    %c0_5 = arith.constant 0 : index
    %c0_6 = arith.constant 0 : index
    %5 = vector.load %arg4[%c0_5, %c0_6] : memref<1x256xf32, #tpu.memory_space<vmem>>, vector<1x256xf32>
    %6 = vector.broadcast %5 : vector<1x256xf32> to vector<144x256xf32>
    %7 = arith.addf %4, %6 : vector<144x256xf32>
    %c0_7 = arith.constant 0 : index
    %c0_8 = arith.constant 0 : index
    %8 = vector.load %arg5[%c0_7, %c0_8] : memref<144x256xf32, #tpu.memory_space<vmem>>, vector<144x256xf32>
    tpu.vector_store %arg5[%c0_7, %c0_8], %7 {strides = array<i32>} : memref<144x256xf32, #tpu.memory_space<vmem>>, vector<144x256xf32>,
    return
  }
  func.func @transform_0(%arg0: i32) -> (i32, i32) {
    %c0_i32 = arith.constant 0 : i32
    %c0_i32_0 = arith.constant 0 : i32
    return %arg0, %c0_i32 : i32, i32
  }
  func.func @transform_1(%arg0: i32) -> (i32, i32) {
    %c0_i32 = arith.constant 0 : i32
    %c0_i32_0 = arith.constant 0 : i32
    return %arg0, %c0_i32 : i32, i32
  }
  func.func @transform_2(%arg0: i32) -> (i32, i32) {
    %c0_i32 = arith.constant 0 : i32
    %c0_i32_0 = arith.constant 0 : i32
    %c0_i32_1 = arith.constant 0 : i32
    return %c0_i32, %c0_i32_0 : i32, i32
  }
  func.func @transform_3(%arg0: i32) -> (i32, i32) {
    %c0_i32 = arith.constant 0 : i32
    %c0_i32_0 = arith.constant 0 : i32
    %c0_i32_1 = arith.constant 0 : i32
    return %c0_i32, %c0_i32_0 : i32, i32
  }
  func.func @transform_4(%arg0: i32) -> (i32, i32) {
    %c0_i32 = arith.constant 0 : i32
    %c0_i32_0 = arith.constant 0 : i32
    return %arg0, %c0_i32 : i32, i32
  }
}

</mosaic_0001>

<llo_original>
// kernel: tpu_custom_call.1
$region0: #{tpu_custom_call.1}
  #allocation0 [shape = 'u32[]', space=smem, size = 0x4, offset = 0x4, fixed_abs, tag = 'smem constant byte address 0x4 - core index']
  #allocation1 [shape = 'u32[72,128]{1,0:T(1,128)}', space=vmem, size = 0x9000, scoped, tag = 'internal scratch']
  %s0 = inlined_call_operand.hbm [shape: f32[8,128], index: 0, kind: input, shape index: {}]
  %s1 = inlined_call_operand.hbm [shape: f32[16,128], index: 1, kind: input, shape index: {}]
  %s2 = inlined_call_operand.hbm [shape: f32[16,128], index: 2, kind: output, shape index: {}]
  %s3 = sld [smem:[#allocation0]]
  $region49: #{tpu_custom_call.1} parent=0
    _
  %s5 = ssub.s32 1, %s3
  %s6 = scalar_select 0, %s5, %s3
  $region1: #{tpu_custom_call.1} parent=0
    #allocation2 [shape = 'u8[4096]{0}', space=vmem, size = 0x1000, scoped, tag = 'input window, operand 0, single buffered']
    #allocation3 [shape = 's32[2]{0}', space=sflag, size = 0x8, scoped, tag = 'scoped memory for tpu_custom_call.1']
    #allocation4 [shape = 's32[2]{0}', space=sflag, size = 0x8, scoped, tag = 'scoped memory for tpu_custom_call.1']
    #allocation5 [shape = 'u8[8192]{0}', space=vmem, size = 0x2000, scoped, tag = 'input window, operand 1']
    #allocation6 [shape = 's32[2]{0}', space=sflag, size = 0x8, scoped, tag = 'scoped memory for tpu_custom_call.1']
    #allocation7 [shape = 'u8[8192]{0}', space=vmem, size = 0x2000, scoped, tag = 'output window, operand 0']
    %7 = vsyncpa [#allocation3], 0
    %8 = vsyncpa [#allocation6], 0
    %s9 = scalar_lea.sflag [#allocation6], 1
    %10 = vsyncpa %s9, 0
    %11 = vsyncpa [#allocation4], 0
    %s12 = scalar_lea.sflag [#allocation4], 1
    %13 = vsyncpa %s12, 0
    loop: start=0, step=1, limit=4
    $region2: #{tpu_custom_call.1} parent=1 // loop_pre_header
      _
    $region3: #{tpu_custom_call.1} parent=1 // loop_header
      %s15 = sphi 0, %s19
      %p16 = scmp.ge.s32.totalorder %s15, 4
      %s23 = sphi 0, %s23
      %s25 = sphi 0, %s23
      %s26 = sphi 0, %s25
      %s40 = sphi 0, %s26
      %s46 = sphi 0, %s48
      %s49 = sphi 0, %s46
      %s50 = sphi 0, %s49
      %s66 = sphi 0, %s50
      %s72 = sphi 0, %s74
      %s75 = sphi 0, %s72
      %s76 = sphi 0, %s75
      %s92 = sphi 0, %s76
    $region4: #{tpu_custom_call.1} parent=1 // loop_header_branch
      %18 = sbr.rel (%p16) target = $region8
    $region5: #{tpu_custom_call.1} parent=1 // loop_body
      %s20 = ssub.s32 %s15, 1
      %s21 = ssub.s32 %s15, 2
      %s22 = sadd.s32 %s15, 1
      %s24 = sadd.s32 %s23, 1
      %p27 = scmp.eq.s32.totalorder %s15, 1
      %p28 = scmp.ne.s32.totalorder %s23, %s25
      %p29 = scmp.eq.s32.totalorder %s15, 0
      %p30 = por %p28, %p29
      %p31 = scmp.ne.s32.totalorder %s23, %s25
      %p32 = scmp.eq.s32.totalorder %s20, 1
      %p33 = por %p31, %p32
      %p34 = scmp.ne.s32.totalorder %s25, %s26
      %p35 = scmp.eq.s32.totalorder %s20, 0
      %p36 = por %p34, %p35
      %p37 = scmp.ne.s32.totalorder %s25, %s26
      %p38 = scmp.eq.s32.totalorder %s21, 1
      %p39 = por %p37, %p38
      %p41 = scmp.ne.s32.totalorder %s26, %s40
      %p42 = scmp.eq.s32.totalorder %s21, 0
      %p43 = por %p41, %p42
      %s44 = ssub.s32 %s15, %s22
      %p45 = scmp.eq.s32.totalorder %s44, 0
      %s47 = sadd.s32 %s46, 1
      %s48 = scalar_select %p45, %s46, %s47
      %p51 = pneg %p45
      %p52 = scmp.eq.s32.totalorder %s15, 1
      %p53 = por %p51, %p52
      %p54 = scmp.ne.s32.totalorder %s46, %s49
      %p55 = scmp.eq.s32.totalorder %s15, 0
      %p56 = por %p54, %p55
      %p57 = scmp.ne.s32.totalorder %s46, %s49
      %p58 = scmp.eq.s32.totalorder %s20, 1
      %p59 = por %p57, %p58
      %p60 = scmp.ne.s32.totalorder %s49, %s50
      %p61 = scmp.eq.s32.totalorder %s20, 0
      %p62 = por %p60, %p61
      %p63 = scmp.ne.s32.totalorder %s49, %s50
      %p64 = scmp.eq.s32.totalorder %s21, 1
      %p65 = por %p63, %p64
      %p67 = scmp.ne.s32.totalorder %s50, %s66
      %p68 = scmp.eq.s32.totalorder %s21, 0
      %p69 = por %p67, %p68
      %s70 = ssub.s32 %s15, %s22
      %p71 = scmp.eq.s32.totalorder %s70, 0
      %s73 = sadd.s32 %s72, 1
      %s74 = scalar_select %p71, %s72, %s73
      %p77 = pneg %p71
      %p78 = scmp.eq.s32.totalorder %s15, 1
      %p79 = por %p77, %p78
      %p80 = scmp.ne.s32.totalorder %s72, %s75
      %p81 = scmp.eq.s32.totalorder %s15, 0
      %p82 = por %p80, %p81
      %p83 = scmp.ne.s32.totalorder %s72, %s75
      %p84 = scmp.eq.s32.totalorder %s20, 1
      %p85 = por %p83, %p84
      %p86 = scmp.ne.s32.totalorder %s75, %s76
      %p87 = scmp.eq.s32.totalorder %s20, 0
      %p88 = por %p86, %p87
      %p89 = scmp.ne.s32.totalorder %s75, %s76
      %p90 = scmp.eq.s32.totalorder %s21, 1
      %p91 = por %p89, %p90
      %p93 = scmp.ne.s32.totalorder %s76, %s92
      %p94 = scmp.eq.s32.totalorder %s21, 0
      %p95 = por %p93, %p94
      %p96 = scmp.le.s32.totalorder 1, %s15
      %p97 = scmp.lt.s32.totalorder %s15, 3
      %p98 = pnand %p96, %p97
      %p99 = pneg %p98
      // Predicated region
      $region9: #{tpu_custom_call.1} parent=5 // pred_check
        _
      $region10: #{tpu_custom_call.1} parent=5 // pred_check_branch
        %101 = sbr.rel (%p98) target = $region12
      $region11: #{tpu_custom_call.1} parent=5 // pred_region
        %s102 = ssub.s32 %s15, 1
        // Predicated region
        $region13: #{tpu_custom_call.1} parent=11 // pred_check
          %p103 = pneg %p36
        $region14: #{tpu_custom_call.1} parent=11 // pred_check_branch
          %105 = sbr.rel (%p103) target = $region16
        $region15: #{tpu_custom_call.1} parent=11 // pred_region
          %107 = vsyncadd [#allocation3], 0
          %s109 = sshll.u32 %s0, 4
          %s110 = int_to_ptr.hbm [resolvable:$true] %s109
          %s111 = sshll.u32 [#allocation2], 4
          %s112 = int_to_ptr.vmem [resolvable:$true] %s111
          %114 = dma.hbm_to_vmem [thread:$0]  %s110, 128, %s112, [#allocation3]
        $region16: #{tpu_custom_call.1} parent=11 // pred_fallthru
          _
      $region12: #{tpu_custom_call.1} parent=5 // pred_fallthru
        _
      %p115 = scmp.lt.s32.totalorder %s15, 2
      // Predicated region
      $region17: #{tpu_custom_call.1} parent=5 // pred_check
        %p116 = pneg %p115
      $region18: #{tpu_custom_call.1} parent=5 // pred_check_branch
        %118 = sbr.rel (%p116) target = $region20
      $region19: #{tpu_custom_call.1} parent=5 // pred_region
        // Predicated region
        $region21: #{tpu_custom_call.1} parent=19 // pred_check
          %p119 = pneg %p56
        $region22: #{tpu_custom_call.1} parent=19 // pred_check_branch
          %121 = sbr.rel (%p119) target = $region24
        $region23: #{tpu_custom_call.1} parent=19 // pred_region
          %s122 = sand.u32 %s46, 1
          %s123 = scalar_lea.sflag [#allocation6], %s122
          %s124 = sand.u32 %s46, 1
          %s125 = smul.addr %s124, 8
          %s126 = scalar_lea.vmem [#allocation5], %s125
          %128 = vsyncadd %s123, 0
          %s129 = smul.addr %s15, 8
          %s130 = scalar_lea.hbm %s1, %s129
          %s132 = sshll.u32 %s130, 4
          %s133 = int_to_ptr.hbm [resolvable:$true] %s132
          %s134 = sshll.u32 %s126, 4
          %s135 = int_to_ptr.vmem [resolvable:$true] %s134
          %137 = dma.hbm_to_vmem [thread:$0]  %s133, 128, %s135, %s123
        $region24: #{tpu_custom_call.1} parent=19 // pred_fallthru
          _
      $region20: #{tpu_custom_call.1} parent=5 // pred_fallthru
        _
      %p138 = scmp.le.s32.totalorder 1, %s15
      %p139 = scmp.lt.s32.totalorder %s15, 3
      %p140 = pnand %p138, %p139
      %p141 = pneg %p140
      // Predicated region
      $region25: #{tpu_custom_call.1} parent=5 // pred_check
        _
      $region26: #{tpu_custom_call.1} parent=5 // pred_check_branch
        %143 = sbr.rel (%p140) target = $region28
      $region27: #{tpu_custom_call.1} parent=5 // pred_region
        %s144 = ssub.s32 %s15, 1
        // Predicated region
        $region29: #{tpu_custom_call.1} parent=27 // pred_check
          %p145 = pneg %p36
        $region30: #{tpu_custom_call.1} parent=27 // pred_check_branch
          %147 = sbr.rel (%p145) target = $region32
        $region31: #{tpu_custom_call.1} parent=27 // pred_region
          %149 = dma.done [#allocation3], 128
        $region32: #{tpu_custom_call.1} parent=27 // pred_fallthru
          _
        %s150 = sand.u32 %s49, 1
        %s151 = scalar_lea.sflag [#allocation6], %s150
        %s152 = sand.u32 %s49, 1
        %s153 = smul.addr %s152, 8
        %s154 = scalar_lea.vmem [#allocation5], %s153
        // Predicated region
        $region33: #{tpu_custom_call.1} parent=27 // pred_check
          %p155 = pneg %p62
        $region34: #{tpu_custom_call.1} parent=27 // pred_check_branch
          %157 = sbr.rel (%p155) target = $region36
        $region35: #{tpu_custom_call.1} parent=27 // pred_region
          %159 = dma.done %s151, 128
        $region36: #{tpu_custom_call.1} parent=27 // pred_fallthru
          _
        %p160 = pneg %p36
        %p161 = pneg %p33
        %s162 = sand.u32 %s49, 1
        %s163 = scalar_lea.sflag [#allocation6], %s162
        %s164 = sand.u32 %s49, 1
        %s165 = smul.addr %s164, 8
        %s166 = scalar_lea.vmem [#allocation5], %s165
        %p167 = pneg %p62
        %p168 = pneg %p59
        %p169 = pneg %p88
        %p170 = pneg %p85
        %s171 = sand.u32 %s75, 1
        %s172 = scalar_lea.sflag [#allocation4], %s171
        %s173 = sand.u32 %s75, 1
        %s174 = smul.addr %s173, 8
        %s175 = scalar_lea.vmem [#allocation7], %s174
        %v176 = vld [vmem:[%s154] sm:$0xff]
        %v177 = vld [vmem:[#allocation2] sm:$0xff]
        %v178 = vadd.f32 %v176, %v177
        %179 = vst [vmem:[%s175] sm:$0xff] %v178
        %s180 = sand.u32 %s75, 1
        %s181 = scalar_lea.sflag [#allocation4], %s180
        %s182 = sand.u32 %s75, 1
        %s183 = smul.addr %s182, 8
        %s184 = scalar_lea.vmem [#allocation7], %s183
        // Predicated region
        $region37: #{tpu_custom_call.1} parent=27 // pred_check
          %p185 = pneg %p85
        $region38: #{tpu_custom_call.1} parent=27 // pred_check_branch
          %187 = sbr.rel (%p185) target = $region40
        $region39: #{tpu_custom_call.1} parent=27 // pred_region
          %189 = vsyncadd %s181, 0
          %s190 = smul.addr %s20, 8
          %s191 = scalar_lea.hbm %s2, %s190
          %s193 = sshll.u32 %s184, 4
          %s194 = int_to_ptr.vmem [resolvable:$true] %s193
          %s195 = sshll.u32 %s191, 4
          %s196 = int_to_ptr.hbm [resolvable:$true] %s195
          %198 = dma.vmem_to_hbm [thread:$0]  %s194, 128, %s196, %s181
        $region40: #{tpu_custom_call.1} parent=27 // pred_fallthru
          _
      $region28: #{tpu_custom_call.1} parent=5 // pred_fallthru
        _
      %p199 = scmp.le.s32.totalorder 2, %s15
      // Predicated region
      $region41: #{tpu_custom_call.1} parent=5 // pred_check
        %p200 = pneg %p199
      $region42: #{tpu_custom_call.1} parent=5 // pred_check_branch
        %202 = sbr.rel (%p200) target = $region44
      $region43: #{tpu_custom_call.1} parent=5 // pred_region
        %s203 = ssub.s32 %s15, 2
        // Predicated region
        $region45: #{tpu_custom_call.1} parent=43 // pred_check
          %p204 = pneg %p91
        $region46: #{tpu_custom_call.1} parent=43 // pred_check_branch
          %206 = sbr.rel (%p204) target = $region48
        $region47: #{tpu_custom_call.1} parent=43 // pred_region
          %s207 = sand.u32 %s76, 1
          %s208 = scalar_lea.sflag [#allocation4], %s207
          %s209 = sand.u32 %s76, 1
          %s210 = smul.addr %s209, 8
          %s211 = scalar_lea.vmem [#allocation7], %s210
          %213 = dma.done %s208, 128
        $region48: #{tpu_custom_call.1} parent=43 // pred_fallthru
          _
      $region44: #{tpu_custom_call.1} parent=5 // pred_fallthru
        _
    $region6: #{tpu_custom_call.1} parent=1 // loop_footer
      %s19 = sadd.s32 1, %s15
    $region7: #{tpu_custom_call.1} parent=1 // loop_footer_branch
      %14 = sbr.rel target = $region3
    $region8: #{tpu_custom_call.1} parent=1 // loop_exit
      _
    %214 = vsyncpa [#allocation3], 1
    %s215 = scalar_lea.sflag [#allocation3], 1
    %216 = vsyncpa %s215, 1
    %217 = vsyncpa [#allocation6], 1
    %s218 = scalar_lea.sflag [#allocation6], 1
    %219 = vsyncpa %s218, 1
    %220 = vsyncpa [#allocation4], 1
    %s221 = scalar_lea.sflag [#allocation4], 1
    %222 = vsyncpa %s221, 1

// kernel: tpu_custom_call.1
$region0: #{tpu_custom_call.1}
  #allocation0 [shape = 'u32[]', space=smem, size = 0x4, offset = 0x4, fixed_abs, tag = 'smem constant byte address 0x4 - core index']
  #allocation1 [shape = 'u32[72,128]{1,0:T(1,128)}', space=vmem, size = 0x9000, scoped, tag = 'internal scratch']
  %s0 = inlined_call_operand.hbm [shape: f32[600,256], index: 0, kind: input, shape index: {}]
  %s1 = inlined_call_operand.hbm [shape: f32[600,128], index: 1, kind: input, shape index: {}]
  %s2 = inlined_call_operand.hbm [shape: f32[128,256], index: 2, kind: input, shape index: {}]
  %s3 = inlined_call_operand.vmem [shape: f32[1,256], index: 3, kind: input, shape index: {}]
  %s4 = inlined_call_operand.hbm [shape: f32[600,256], index: 4, kind: output, shape index: {}]
  %s5 = sld [smem:[#allocation0]]
  $region61: #{tpu_custom_call.1} parent=0
    _
  %s7 = ssub.s32 1, %s5
  %s8 = scalar_select 0, %s7, %s5
  $region1: #{tpu_custom_call.1} parent=0
    #allocation2 [shape = 'u8[294912]{0}', space=vmem, size = 0x48000, scoped, tag = 'input window, operand 0']
    #allocation3 [shape = 's32[2]{0}', space=sflag, size = 0x8, scoped, tag = 'scoped memory for tpu_custom_call.1']
    #allocation4 [shape = 's32[2]{0}', space=sflag, size = 0x8, scoped, tag = 'scoped memory for tpu_custom_call.1']
    #allocation5 [shape = 'u8[147456]{0}', space=vmem, size = 0x24000, scoped, tag = 'input window, operand 1']
    #allocation6 [shape = 's32[2]{0}', space=sflag, size = 0x8, scoped, tag = 'scoped memory for tpu_custom_call.1']
    #allocation7 [shape = 'u8[131072]{0}', space=vmem, size = 0x20000, scoped, tag = 'input window, operand 2, single buffered']
    #allocation8 [shape = 'u8[294912]{0}', space=vmem, size = 0x48000, scoped, tag = 'output window, operand 0']
    %9 = vsyncpa [#allocation3], 0
    %s10 = scalar_lea.sflag [#allocation3], 1
    %11 = vsyncpa %s10, 0
    %12 = vsyncpa [#allocation6], 0
    %s13 = scalar_lea.sflag [#allocation6], 1
    %14 = vsyncpa %s13, 0
    %15 = vsyncpa [#allocation4], 0
    %s16 = scalar_lea.sflag [#allocation4], 1
    %17 = vsyncpa %s16, 0
    loop: start=0, step=1, limit=7
    $region2: #{tpu_custom_call.1} parent=1 // loop_pre_header
      _
    $region3: #{tpu_custom_call.1} parent=1 // loop_header
      %s19 = sphi 0, %s23
      %p20 = scmp.ge.s32.totalorder %s19, 7
      %s29 = sphi 0, %s31
      %s32 = sphi 0, %s29
      %s33 = sphi 0, %s32
      %s49 = sphi 0, %s33
      %s55 = sphi 0, %s57
      %s58 = sphi 0, %s55
      %s59 = sphi 0, %s58
      %s75 = sphi 0, %s59
      %s79 = sphi 0, %s79
      %s81 = sphi 0, %s79
      %s82 = sphi 0, %s81
      %s96 = sphi 0, %s82
      %s100 = sphi 0, %s100
      %s102 = sphi 0, %s100
      %s103 = sphi 0, %s102
      %s117 = sphi 0, %s103
      %s123 = sphi 0, %s125
      %s126 = sphi 0, %s123
      %s127 = sphi 0, %s126
      %s143 = sphi 0, %s127
    $region4: #{tpu_custom_call.1} parent=1 // loop_header_branch
      %22 = sbr.rel (%p20) target = $region8
    $region5: #{tpu_custom_call.1} parent=1 // loop_body
      %s24 = ssub.s32 %s19, 1
      %s25 = ssub.s32 %s19, 2
      %s26 = sadd.s32 %s19, 1
      %s27 = ssub.s32 %s19, %s26
      %p28 = scmp.eq.s32.totalorder %s27, 0
      %s30 = sadd.s32 %s29, 1
      %s31 = scalar_select %p28, %s29, %s30
      %p34 = pneg %p28
      %p35 = scmp.eq.s32.totalorder %s19, 4
      %p36 = por %p34, %p35
      %p37 = scmp.ne.s32.totalorder %s29, %s32
      %p38 = scmp.eq.s32.totalorder %s19, 0
      %p39 = por %p37, %p38
      %p40 = scmp.ne.s32.totalorder %s29, %s32
      %p41 = scmp.eq.s32.totalorder %s24, 4
      %p42 = por %p40, %p41
      %p43 = scmp.ne.s32.totalorder %s32, %s33
      %p44 = scmp.eq.s32.totalorder %s24, 0
      %p45 = por %p43, %p44
      %p46 = scmp.ne.s32.totalorder %s32, %s33
      %p47 = scmp.eq.s32.totalorder %s25, 4
      %p48 = por %p46, %p47
      %p50 = scmp.ne.s32.totalorder %s33, %s49
      %p51 = scmp.eq.s32.totalorder %s25, 0
      %p52 = por %p50, %p51
      %s53 = ssub.s32 %s19, %s26
      %p54 = scmp.eq.s32.totalorder %s53, 0
      %s56 = sadd.s32 %s55, 1
      %s57 = scalar_select %p54, %s55, %s56
      %p60 = pneg %p54
      %p61 = scmp.eq.s32.totalorder %s19, 4
      %p62 = por %p60, %p61
      %p63 = scmp.ne.s32.totalorder %s55, %s58
      %p64 = scmp.eq.s32.totalorder %s19, 0
      %p65 = por %p63, %p64
      %p66 = scmp.ne.s32.totalorder %s55, %s58
      %p67 = scmp.eq.s32.totalorder %s24, 4
      %p68 = por %p66, %p67
      %p69 = scmp.ne.s32.totalorder %s58, %s59
      %p70 = scmp.eq.s32.totalorder %s24, 0
      %p71 = por %p69, %p70
      %p72 = scmp.ne.s32.totalorder %s58, %s59
      %p73 = scmp.eq.s32.totalorder %s25, 4
      %p74 = por %p72, %p73
      %p76 = scmp.ne.s32.totalorder %s59, %s75
      %p77 = scmp.eq.s32.totalorder %s25, 0
      %p78 = por %p76, %p77
      %s80 = sadd.s32 %s79, 1
      %p83 = scmp.eq.s32.totalorder %s19, 4
      %p84 = scmp.ne.s32.totalorder %s79, %s81
      %p85 = scmp.eq.s32.totalorder %s19, 0
      %p86 = por %p84, %p85
      %p87 = scmp.ne.s32.totalorder %s79, %s81
      %p88 = scmp.eq.s32.totalorder %s24, 4
      %p89 = por %p87, %p88
      %p90 = scmp.ne.s32.totalorder %s81, %s82
      %p91 = scmp.eq.s32.totalorder %s24, 0
      %p92 = por %p90, %p91
      %p93 = scmp.ne.s32.totalorder %s81, %s82
      %p94 = scmp.eq.s32.totalorder %s25, 4
      %p95 = por %p93, %p94
      %p97 = scmp.ne.s32.totalorder %s82, %s96
      %p98 = scmp.eq.s32.totalorder %s25, 0
      %p99 = por %p97, %p98
      %s101 = sadd.s32 %s100, 1
      %p104 = scmp.eq.s32.totalorder %s19, 4
      %p105 = scmp.ne.s32.totalorder %s100, %s102
      %p106 = scmp.eq.s32.totalorder %s19, 0
      %p107 = por %p105, %p106
      %p108 = scmp.ne.s32.totalorder %s100, %s102
      %p109 = scmp.eq.s32.totalorder %s24, 4
      %p110 = por %p108, %p109
      %p111 = scmp.ne.s32.totalorder %s102, %s103
      %p112 = scmp.eq.s32.totalorder %s24, 0
      %p113 = por %p111, %p112
      %p114 = scmp.ne.s32.totalorder %s102, %s103
      %p115 = scmp.eq.s32.totalorder %s25, 4
      %p116 = por %p114, %p115
      %p118 = scmp.ne.s32.totalorder %s103, %s117
      %p119 = scmp.eq.s32.totalorder %s25, 0
      %p120 = por %p118, %p119
      %s121 = ssub.s32 %s19, %s26
      %p122 = scmp.eq.s32.totalorder %s121, 0
      %s124 = sadd.s32 %s123, 1
      %s125 = scalar_select %p122, %s123, %s124
      %p128 = pneg %p122
      %p129 = scmp.eq.s32.totalorder %s19, 4
      %p130 = por %p128, %p129
      %p131 = scmp.ne.s32.totalorder %s123, %s126
      %p132 = scmp.eq.s32.totalorder %s19, 0
      %p133 = por %p131, %p132
      %p134 = scmp.ne.s32.totalorder %s123, %s126
      %p135 = scmp.eq.s32.totalorder %s24, 4
      %p136 = por %p134, %p135
      %p137 = scmp.ne.s32.totalorder %s126, %s127
      %p138 = scmp.eq.s32.totalorder %s24, 0
      %p139 = por %p137, %p138
      %p140 = scmp.ne.s32.totalorder %s126, %s127
      %p141 = scmp.eq.s32.totalorder %s25, 4
      %p142 = por %p140, %p141
      %p144 = scmp.ne.s32.totalorder %s127, %s143
      %p145 = scmp.eq.s32.totalorder %s25, 0
      %p146 = por %p144, %p145
      %p147 = scmp.le.s32.totalorder 1, %s19
      %p148 = scmp.lt.s32.totalorder %s19, 6
      %p149 = pnand %p147, %p148
      %p150 = pneg %p149
      // Predicated region
      $region9: #{tpu_custom_call.1} parent=5 // pred_check
        _
      $region10: #{tpu_custom_call.1} parent=5 // pred_check_branch
        %152 = sbr.rel (%p149) target = $region12
      $region11: #{tpu_custom_call.1} parent=5 // pred_region
        %s153 = ssub.s32 %s19, 1
        // Predicated region
        $region13: #{tpu_custom_call.1} parent=11 // pred_check
          %p154 = pneg %p92
        $region14: #{tpu_custom_call.1} parent=11 // pred_check_branch
          %156 = sbr.rel (%p154) target = $region16
        $region15: #{tpu_custom_call.1} parent=11 // pred_region
          %158 = vsyncadd [#allocation6], 0
          %s159 = sshll.u32 %s2, 4
          %s160 = int_to_ptr.hbm [resolvable:$true] %s159
          %s161 = sshll.u32 [#allocation7], 4
          %s162 = int_to_ptr.vmem [resolvable:$true] %s161
          %167 = dma.hbm_to_vmem [thread:$0]  %s160, 4096, %s162, [#allocation6], 256, 256, 16
        $region16: #{tpu_custom_call.1} parent=11 // pred_fallthru
          _
        // Predicated region
        $region17: #{tpu_custom_call.1} parent=11 // pred_check
          %p168 = pneg %p113
        $region18: #{tpu_custom_call.1} parent=11 // pred_check_branch
          %170 = sbr.rel (%p168) target = $region20
        $region19: #{tpu_custom_call.1} parent=11 // pred_region
          _
        $region20: #{tpu_custom_call.1} parent=11 // pred_fallthru
          _
      $region12: #{tpu_custom_call.1} parent=5 // pred_fallthru
        _
      %p171 = scmp.lt.s32.totalorder %s19, 5
      // Predicated region
      $region21: #{tpu_custom_call.1} parent=5 // pred_check
        %p172 = pneg %p171
      $region22: #{tpu_custom_call.1} parent=5 // pred_check_branch
        %174 = sbr.rel (%p172) target = $region24
      $region23: #{tpu_custom_call.1} parent=5 // pred_region
        // Predicated region
        $region25: #{tpu_custom_call.1} parent=23 // pred_check
          %p175 = pneg %p39
        $region26: #{tpu_custom_call.1} parent=23 // pred_check_branch
          %177 = sbr.rel (%p175) target = $region28
        $region27: #{tpu_custom_call.1} parent=23 // pred_region
          %s178 = sand.u32 %s29, 1
          %s179 = scalar_lea.sflag [#allocation3], %s178
          %s180 = sand.u32 %s29, 1
          %s181 = smul.addr %s180, 288
          %s182 = scalar_lea.vmem [#allocation2], %s181
          %s183 = smul.u32 18, %s19
          %s184 = ssub.s32 75, %s183
          %p185 = scmp.lt.s32.totalorder %s184, 18
          %s186 = scalar_select %p185, %s184, 18
          %s187 = smul.u32 8, %s186
          %s188 = smul.u32 %s187, 2
          %s189 = ssub.s32 288, %s188
          %s190 = sshll.u32 %s189, 4
          %191 = vsyncadd %s179, %s190
          %p192 = scmp.ne.s32.totalorder 0, %s188
          %s193 = smul.addr %s183, 2
          %s194 = smul.addr %s193, 8
          %s195 = scalar_lea.hbm %s0, %s194
          %s196 = smul.u32 16, %s186
          %s197 = sshll.u32 %s195, 4
          %s198 = int_to_ptr.hbm [resolvable:$true] %s197
          %s199 = sshll.u32 %s182, 4
          %s200 = int_to_ptr.vmem [resolvable:$true] %s199
          %s201 = sshll.u32 %s196, 4
          %205 = dma.hbm_to_vmem [thread:$0]  (%p192), %s198, %s201, %s200, %s179, 256, 256, 16
        $region28: #{tpu_custom_call.1} parent=23 // pred_fallthru
          _
        // Predicated region
        $region29: #{tpu_custom_call.1} parent=23 // pred_check
          %p206 = pneg %p65
        $region30: #{tpu_custom_call.1} parent=23 // pred_check_branch
          %208 = sbr.rel (%p206) target = $region32
        $region31: #{tpu_custom_call.1} parent=23 // pred_region
          %s209 = sand.u32 %s19, 1
          %s210 = scalar_lea.sflag [#allocation6], %s209
          %s211 = sand.u32 %s55, 1
          %s212 = smul.addr %s211, 144
          %s213 = scalar_lea.vmem [#allocation5], %s212
          %s214 = smul.u32 18, %s19
          %s215 = ssub.s32 75, %s214
          %p216 = scmp.lt.s32.totalorder %s215, 18
          %s217 = scalar_select %p216, %s215, 18
          %s218 = smul.u32 8, %s217
          %s219 = ssub.s32 144, %s218
          %s220 = sshll.u32 %s219, 4
          %221 = vsyncadd %s210, %s220
          %p222 = scmp.ne.s32.totalorder 0, %s218
          %s223 = smul.addr %s214, 8
          %s224 = scalar_lea.hbm %s1, %s223
          %s225 = smul.u32 8, %s217
          %s226 = sshll.u32 %s224, 4
          %s227 = int_to_ptr.hbm [resolvable:$true] %s226
          %s228 = sshll.u32 %s213, 4
          %s229 = int_to_ptr.vmem [resolvable:$true] %s228
          %s230 = sshll.u32 %s225, 4
          %234 = dma.hbm_to_vmem [thread:$0]  (%p222), %s227, %s230, %s229, %s210, 128, 128, 8
        $region32: #{tpu_custom_call.1} parent=23 // pred_fallthru
          _
      $region24: #{tpu_custom_call.1} parent=5 // pred_fallthru
        _
      %p235 = scmp.le.s32.totalorder 1, %s19
      %p236 = scmp.lt.s32.totalorder %s19, 6
      %p237 = pnand %p235, %p236
      %p238 = pneg %p237
      // Predicated region
      $region33: #{tpu_custom_call.1} parent=5 // pred_check
        _
      $region34: #{tpu_custom_call.1} parent=5 // pred_check_branch
        %240 = sbr.rel (%p237) target = $region36
      $region35: #{tpu_custom_call.1} parent=5 // pred_region
        %s241 = ssub.s32 %s19, 1
        %s242 = sand.u32 %s32, 1
        %s243 = scalar_lea.sflag [#allocation3], %s242
        %s244 = sand.u32 %s32, 1
        %s245 = smul.addr %s244, 288
        %s246 = scalar_lea.vmem [#allocation2], %s245
        // Predicated region
        $region37: #{tpu_custom_call.1} parent=35 // pred_check
          %p247 = pneg %p45
        $region38: #{tpu_custom_call.1} parent=35 // pred_check_branch
          %249 = sbr.rel (%p247) target = $region40
        $region39: #{tpu_custom_call.1} parent=35 // pred_region
          %251 = dma.done %s243, 4608
        $region40: #{tpu_custom_call.1} parent=35 // pred_fallthru
          _
        %s252 = sand.u32 %s24, 1
        %s253 = scalar_lea.sflag [#allocation6], %s252
        %s254 = sand.u32 %s58, 1
        %s255 = smul.addr %s254, 144
        %s256 = scalar_lea.vmem [#allocation5], %s255
        // Predicated region
        $region41: #{tpu_custom_call.1} parent=35 // pred_check
          %p257 = pneg %p71
        $region42: #{tpu_custom_call.1} parent=35 // pred_check_branch
          %259 = sbr.rel (%p257) target = $region44
        $region43: #{tpu_custom_call.1} parent=35 // pred_region
          %261 = dma.done %s253, 2304
        $region44: #{tpu_custom_call.1} parent=35 // pred_fallthru
          _
        // Predicated region
        $region45: #{tpu_custom_call.1} parent=35 // pred_check
          %p262 = pneg %p92
        $region46: #{tpu_custom_call.1} parent=35 // pred_check_branch
          %264 = sbr.rel (%p262) target = $region48
        $region47: #{tpu_custom_call.1} parent=35 // pred_region
          %266 = dma.done [#allocation6], 4096
        $region48: #{tpu_custom_call.1} parent=35 // pred_fallthru
          _
        %s267 = sand.u32 %s32, 1
        %s268 = scalar_lea.sflag [#allocation3], %s267
        %s269 = sand.u32 %s32, 1
        %s270 = smul.addr %s269, 288
        %s271 = scalar_lea.vmem [#allocation2], %s270
        %p272 = pneg %p45
        %p273 = pneg %p42
        %s274 = sand.u32 %s24, 1
        %s275 = scalar_lea.sflag [#allocation6], %s274
        %s276 = sand.u32 %s58, 1
        %s277 = smul.addr %s276, 144
        %s278 = scalar_lea.vmem [#allocation5], %s277
        %p279 = pneg %p71
        %p280 = pneg %p68
        %p281 = pneg %p92
        %p282 = pneg %p89
        %p283 = pneg %p113
        %p284 = pneg %p110
        %p285 = pneg %p139
        %p286 = pneg %p136
        %s287 = sand.u32 %s126, 1
        %s288 = scalar_lea.sflag [#allocation4], %s287
        %s289 = sand.u32 %s126, 1
        %s290 = smul.addr %s289, 288
        %s291 = scalar_lea.vmem [#allocation8], %s290
        %s292 = smul.u32 18, %s24
        %s293 = ssub.s32 75, %s292
        %p294 = scmp.lt.s32.totalorder %s293, 18
        %s295 = scalar_select %p294, %s293, 18
        %s296 = smul.u32 8, %s295
        %s297 = smul.u32 %s296, 2
        %s298 = smul.u32 18, %s24
        %s299 = ssub.s32 75, %s298
        %p300 = scmp.lt.s32.totalorder %s299, 18
        %s301 = scalar_select %p300, %s299, 18
        %s302 = smul.u32 8, %s301
        %s303 = smul.u32 18, %s24
        %s304 = ssub.s32 75, %s303
        %p305 = scmp.lt.s32.totalorder %s304, 18
        %s306 = scalar_select %p305, %s304, 18
        %s307 = smul.u32 8, %s306
        %s308 = smul.u32 %s307, 2
        %v309 = vld [vmem:[%s256] sm:$0xff]
        %v310 = vld [vmem:[%s256 + $0x8] sm:$0xff]
        %v311 = vld [vmem:[%s256 + $0x10] sm:$0xff]
        %v312 = vld [vmem:[%s256 + $0x18] sm:$0xff]
        %v313 = vld [vmem:[%s256 + $0x20] sm:$0xff]
        %v314 = vld [vmem:[%s256 + $0x28] sm:$0xff]
        %v315 = vld [vmem:[%s256 + $0x30] sm:$0xff]
        %v316 = vld [vmem:[%s256 + $0x38] sm:$0xff]
        %v317 = vld [vmem:[%s256 + $0x40] sm:$0xff]
        %v318 = vld [vmem:[%s256 + $0x48] sm:$0xff]
        %v319 = vld [vmem:[%s256 + $0x50] sm:$0xff]
        %v320 = vld [vmem:[%s256 + $0x58] sm:$0xff]
        %v321 = vld [vmem:[%s256 + $0x60] sm:$0xff]
        %v322 = vld [vmem:[%s256 + $0x68] sm:$0xff]
        %v323 = vld [vmem:[%s256 + $0x70] sm:$0xff]
        %v324 = vld [vmem:[%s256 + $0x78] sm:$0xff]
        %v325 = vld [vmem:[%s256 + $0x80] sm:$0xff]
        %v326 = vld [vmem:[%s256 + $0x88] sm:$0xff]
        %v327 = vld [vmem:[#allocation7] sm:$0xff]
        %v328 = vld [vmem:[#allocation7 + $0x8] sm:$0xff]
        %v329 = vld [vmem:[#allocation7 + $0x10] sm:$0xff]
        %v330 = vld [vmem:[#allocation7 + $0x18] sm:$0xff]
        %v331 = vld [vmem:[#allocation7 + $0x20] sm:$0xff]
        %v332 = vld [vmem:[#allocation7 + $0x28] sm:$0xff]
        %v333 = vld [vmem:[#allocation7 + $0x30] sm:$0xff]
        %v334 = vld [vmem:[#allocation7 + $0x38] sm:$0xff]
        %v335 = vld [vmem:[#allocation7 + $0x40] sm:$0xff]
        %v336 = vld [vmem:[#allocation7 + $0x48] sm:$0xff]
        %v337 = vld [vmem:[#allocation7 + $0x50] sm:$0xff]
        %v338 = vld [vmem:[#allocation7 + $0x58] sm:$0xff]
        %v339 = vld [vmem:[#allocation7 + $0x60] sm:$0xff]
        %v340 = vld [vmem:[#allocation7 + $0x68] sm:$0xff]
        %v341 = vld [vmem:[#allocation7 + $0x70] sm:$0xff]
        %v342 = vld [vmem:[#allocation7 + $0x78] sm:$0xff]
        %v343 = vld [vmem:[#allocation7 + $0x80] sm:$0xff]
        %v344 = vld [vmem:[#allocation7 + $0x88] sm:$0xff]
        %v345 = vld [vmem:[#allocation7 + $0x90] sm:$0xff]
        %v346 = vld [vmem:[#allocation7 + $0x98] sm:$0xff]
        %v347 = vld [vmem:[#allocation7 + $0xa0] sm:$0xff]
        %v348 = vld [vmem:[#allocation7 + $0xa8] sm:$0xff]
        %v349 = vld [vmem:[#allocation7 + $0xb0] sm:$0xff]
        %v350 = vld [vmem:[#allocation7 + $0xb8] sm:$0xff]
        %v351 = vld [vmem:[#allocation7 + $0xc0] sm:$0xff]
        %v352 = vld [vmem:[#allocation7 + $0xc8] sm:$0xff]
        %v353 = vld [vmem:[#allocation7 + $0xd0] sm:$0xff]
        %v354 = vld [vmem:[#allocation7 + $0xd8] sm:$0xff]
        %v355 = vld [vmem:[#allocation7 + $0xe0] sm:$0xff]
        %v356 = vld [vmem:[#allocation7 + $0xe8] sm:$0xff]
        %v357 = vld [vmem:[#allocation7 + $0xf0] sm:$0xff]
        %v358 = vld [vmem:[#allocation7 + $0xf8] sm:$0xff]
        %359 = vmatpush.msra.mxu0 %v357
        %360 = vmatpush.msra.mxu0 %v355
        %361 = vmatpush.msra.mxu0 %v353
        %362 = vmatpush.msra.mxu0 %v351
        %363 = vmatpush.msra.mxu0 %v349
        %364 = vmatpush.msra.mxu0 %v347
        %365 = vmatpush.msra.mxu0 %v345
        %366 = vmatpush.msra.mxu0 %v343
        %367 = vmatpush.msra.mxu0 %v341
        %368 = vmatpush.msra.mxu0 %v339
        %369 = vmatpush.msra.mxu0 %v337
        %370 = vmatpush.msra.mxu0 %v335
        %371 = vmatpush.msra.mxu0 %v333
        %372 = vmatpush.msra.mxu0 %v331
        %373 = vmatpush.msra.mxu0 %v329
        %374 = vmatpush.msra.mxu0 %v327
        %375 = vmatmul.f32.gmra.mxu0 %v309
        %v376 = vpop.f32.mrf.mxu0
        %v377 = vadd.f32 0.0, %v376
        %378 = vmatmul.f32.gmra.mxu0 %v310
        %v379 = vpop.f32.mrf.mxu0
        %v380 = vadd.f32 0.0, %v379
        %381 = vmatmul.f32.gmra.mxu0 %v311
        %v382 = vpop.f32.mrf.mxu0
        %v383 = vadd.f32 0.0, %v382
        %384 = vmatmul.f32.gmra.mxu0 %v312
        %v385 = vpop.f32.mrf.mxu0
        %v386 = vadd.f32 0.0, %v385
        %387 = vmatmul.f32.gmra.mxu0 %v313
        %v388 = vpop.f32.mrf.mxu0
        %v389 = vadd.f32 0.0, %v388
        %390 = vmatmul.f32.gmra.mxu0 %v314
        %v391 = vpop.f32.mrf.mxu0
        %v392 = vadd.f32 0.0, %v391
        %393 = vmatmul.f32.gmra.mxu0 %v315
        %v394 = vpop.f32.mrf.mxu0
        %v395 = vadd.f32 0.0, %v394
        %396 = vmatmul.f32.gmra.mxu0 %v316
        %v397 = vpop.f32.mrf.mxu0
        %v398 = vadd.f32 0.0, %v397
        %399 = vmatmul.f32.gmra.mxu0 %v317
        %v400 = vpop.f32.mrf.mxu0
        %v401 = vadd.f32 0.0, %v400
        %402 = vmatmul.f32.gmra.mxu0 %v318
        %v403 = vpop.f32.mrf.mxu0
        %v404 = vadd.f32 0.0, %v403
        %405 = vmatmul.f32.gmra.mxu0 %v319
        %v406 = vpop.f32.mrf.mxu0
        %v407 = vadd.f32 0.0, %v406
        %408 = vmatmul.f32.gmra.mxu0 %v320
        %v409 = vpop.f32.mrf.mxu0
        %v410 = vadd.f32 0.0, %v409
        %411 = vmatmul.f32.gmra.mxu0 %v321
        %v412 = vpop.f32.mrf.mxu0
        %v413 = vadd.f32 0.0, %v412
        %414 = vmatmul.f32.gmra.mxu0 %v322
        %v415 = vpop.f32.mrf.mxu0
        %v416 = vadd.f32 0.0, %v415
        %417 = vmatmul.f32.gmra.mxu0 %v323
        %v418 = vpop.f32.mrf.mxu0
        %v419 = vadd.f32 0.0, %v418
        %420 = vmatmul.f32.gmra.mxu0 %v324
        %v421 = vpop.f32.mrf.mxu0
        %v422 = vadd.f32 0.0, %v421
        %423 = vmatmul.f32.gmra.mxu0 %v325
        %v424 = vpop.f32.mrf.mxu0
        %v425 = vadd.f32 0.0, %v424
        %426 = vmatmul.f32.gmra.mxu0 %v326
        %v427 = vpop.f32.mrf.mxu0
        %v428 = vadd.f32 0.0, %v427
        %429 = vdwg.mxu0
        %430 = vmatpush.msra.mxu0 %v358
        %431 = vmatpush.msra.mxu0 %v356
        %432 = vmatpush.msra.mxu0 %v354
        %433 = vmatpush.msra.mxu0 %v352
        %434 = vmatpush.msra.mxu0 %v350
        %435 = vmatpush.msra.mxu0 %v348
        %436 = vmatpush.msra.mxu0 %v346
        %437 = vmatpush.msra.mxu0 %v344
        %438 = vmatpush.msra.mxu0 %v342
        %439 = vmatpush.msra.mxu0 %v340
        %440 = vmatpush.msra.mxu0 %v338
        %441 = vmatpush.msra.mxu0 %v336
        %442 = vmatpush.msra.mxu0 %v334
        %443 = vmatpush.msra.mxu0 %v332
        %444 = vmatpush.msra.mxu0 %v330
        %445 = vmatpush.msra.mxu0 %v328
        %446 = vmatmul.f32.gmra.mxu0 %v309
        %v447 = vpop.f32.mrf.mxu0
        %v448 = vadd.f32 0.0, %v447
        %449 = vmatmul.f32.gmra.mxu0 %v310
        %v450 = vpop.f32.mrf.mxu0
        %v451 = vadd.f32 0.0, %v450
        %452 = vmatmul.f32.gmra.mxu0 %v311
        %v453 = vpop.f32.mrf.mxu0
        %v454 = vadd.f32 0.0, %v453
        %455 = vmatmul.f32.gmra.mxu0 %v312
        %v456 = vpop.f32.mrf.mxu0
        %v457 = vadd.f32 0.0, %v456
        %458 = vmatmul.f32.gmra.mxu0 %v313
        %v459 = vpop.f32.mrf.mxu0
        %v460 = vadd.f32 0.0, %v459
        %461 = vmatmul.f32.gmra.mxu0 %v314
        %v462 = vpop.f32.mrf.mxu0
        %v463 = vadd.f32 0.0, %v462
        %464 = vmatmul.f32.gmra.mxu0 %v315
        %v465 = vpop.f32.mrf.mxu0
        %v466 = vadd.f32 0.0, %v465
        %467 = vmatmul.f32.gmra.mxu0 %v316
        %v468 = vpop.f32.mrf.mxu0
        %v469 = vadd.f32 0.0, %v468
        %470 = vmatmul.f32.gmra.mxu0 %v317
        %v471 = vpop.f32.mrf.mxu0
        %v472 = vadd.f32 0.0, %v471
        %473 = vmatmul.f32.gmra.mxu0 %v318
        %v474 = vpop.f32.mrf.mxu0
        %v475 = vadd.f32 0.0, %v474
        %476 = vmatmul.f32.gmra.mxu0 %v319
        %v477 = vpop.f32.mrf.mxu0
        %v478 = vadd.f32 0.0, %v477
        %479 = vmatmul.f32.gmra.mxu0 %v320
        %v480 = vpop.f32.mrf.mxu0
        %v481 = vadd.f32 0.0, %v480
        %482 = vmatmul.f32.gmra.mxu0 %v321
        %v483 = vpop.f32.mrf.mxu0
        %v484 = vadd.f32 0.0, %v483
        %485 = vmatmul.f32.gmra.mxu0 %v322
        %v486 = vpop.f32.mrf.mxu0
        %v487 = vadd.f32 0.0, %v486
        %488 = vmatmul.f32.gmra.mxu0 %v323
        %v489 = vpop.f32.mrf.mxu0
        %v490 = vadd.f32 0.0, %v489
        %491 = vmatmul.f32.gmra.mxu0 %v324
        %v492 = vpop.f32.mrf.mxu0
        %v493 = vadd.f32 0.0, %v492
        %494 = vmatmul.f32.gmra.mxu0 %v325
        %v495 = vpop.f32.mrf.mxu0
        %v496 = vadd.f32 0.0, %v495
        %497 = vmatmul.f32.gmra.mxu0 %v326
        %v498 = vpop.f32.mrf.mxu0
        %v499 = vadd.f32 0.0, %v498
        %500 = vdwg.mxu0
        %v501 = vld [vmem:[%s246] sm:$0xff]
        %v502 = vld [vmem:[%s246 + $0x8] sm:$0xff]
        %v503 = vld [vmem:[%s246 + $0x10] sm:$0xff]
        %v504 = vld [vmem:[%s246 + $0x18] sm:$0xff]
        %v505 = vld [vmem:[%s246 + $0x20] sm:$0xff]
        %v506 = vld [vmem:[%s246 + $0x28] sm:$0xff]
        %v507 = vld [vmem:[%s246 + $0x30] sm:$0xff]
        %v508 = vld [vmem:[%s246 + $0x38] sm:$0xff]
        %v509 = vld [vmem:[%s246 + $0x40] sm:$0xff]
        %v510 = vld [vmem:[%s246 + $0x48] sm:$0xff]
        %v511 = vld [vmem:[%s246 + $0x50] sm:$0xff]
        %v512 = vld [vmem:[%s246 + $0x58] sm:$0xff]
        %v513 = vld [vmem:[%s246 + $0x60] sm:$0xff]
        %v514 = vld [vmem:[%s246 + $0x68] sm:$0xff]
        %v515 = vld [vmem:[%s246 + $0x70] sm:$0xff]
        %v516 = vld [vmem:[%s246 + $0x78] sm:$0xff]
        %v517 = vld [vmem:[%s246 + $0x80] sm:$0xff]
        %v518 = vld [vmem:[%s246 + $0x88] sm:$0xff]
        %v519 = vld [vmem:[%s246 + $0x90] sm:$0xff]
        %v520 = vld [vmem:[%s246 + $0x98] sm:$0xff]
        %v521 = vld [vmem:[%s246 + $0xa0] sm:$0xff]
        %v522 = vld [vmem:[%s246 + $0xa8] sm:$0xff]
        %v523 = vld [vmem:[%s246 + $0xb0] sm:$0xff]
        %v524 = vld [vmem:[%s246 + $0xb8] sm:$0xff]
        %v525 = vld [vmem:[%s246 + $0xc0] sm:$0xff]
        %v526 = vld [vmem:[%s246 + $0xc8] sm:$0xff]
        %v527 = vld [vmem:[%s246 + $0xd0] sm:$0xff]
        %v528 = vld [vmem:[%s246 + $0xd8] sm:$0xff]
        %v529 = vld [vmem:[%s246 + $0xe0] sm:$0xff]
        %v530 = vld [vmem:[%s246 + $0xe8] sm:$0xff]
        %v531 = vld [vmem:[%s246 + $0xf0] sm:$0xff]
        %v532 = vld [vmem:[%s246 + $0xf8] sm:$0xff]
        %v533 = vld [vmem:[%s246 + $0x100] sm:$0xff]
        %v534 = vld [vmem:[%s246 + $0x108] sm:$0xff]
        %v535 = vld [vmem:[%s246 + $0x110] sm:$0xff]
        %v536 = vld [vmem:[%s246 + $0x118] sm:$0xff]
        %v537 = vadd.f32 %v501, %v377
        %v538 = vadd.f32 %v502, %v448
        %v539 = vadd.f32 %v503, %v380
        %v540 = vadd.f32 %v504, %v451
        %v541 = vadd.f32 %v505, %v383
        %v542 = vadd.f32 %v506, %v454
        %v543 = vadd.f32 %v507, %v386
        %v544 = vadd.f32 %v508, %v457
        %v545 = vadd.f32 %v509, %v389
        %v546 = vadd.f32 %v510, %v460
        %v547 = vadd.f32 %v511, %v392
        %v548 = vadd.f32 %v512, %v463
        %v549 = vadd.f32 %v513, %v395
        %v550 = vadd.f32 %v514, %v466
        %v551 = vadd.f32 %v515, %v398
        %v552 = vadd.f32 %v516, %v469
        %v553 = vadd.f32 %v517, %v401
        %v554 = vadd.f32 %v518, %v472
        %v555 = vadd.f32 %v519, %v404
        %v556 = vadd.f32 %v520, %v475
        %v557 = vadd.f32 %v521, %v407
        %v558 = vadd.f32 %v522, %v478
        %v559 = vadd.f32 %v523, %v410
        %v560 = vadd.f32 %v524, %v481
        %v561 = vadd.f32 %v525, %v413
        %v562 = vadd.f32 %v526, %v484
        %v563 = vadd.f32 %v527, %v416
        %v564 = vadd.f32 %v528, %v487
        %v565 = vadd.f32 %v529, %v419
        %v566 = vadd.f32 %v530, %v490
        %v567 = vadd.f32 %v531, %v422
        %v568 = vadd.f32 %v532, %v493
        %v569 = vadd.f32 %v533, %v425
        %v570 = vadd.f32 %v534, %v496
        %v571 = vadd.f32 %v535, %v428
        %v572 = vadd.f32 %v536, %v499
        %v573 = vld [vmem:[%s3] sm:$0x3]
        %v575 = vperm.slane %v573, 0
        %v576 = vperm.slane %v573, 1
        %v579 = vadd.f32 %v537, %v575
        %v580 = vadd.f32 %v538, %v576
        %v581 = vadd.f32 %v539, %v575
        %v582 = vadd.f32 %v540, %v576
        %v583 = vadd.f32 %v541, %v575
        %v584 = vadd.f32 %v542, %v576
        %v585 = vadd.f32 %v543, %v575
        %v586 = vadd.f32 %v544, %v576
        %v587 = vadd.f32 %v545, %v575
        %v588 = vadd.f32 %v546, %v576
        %v589 = vadd.f32 %v547, %v575
        %v590 = vadd.f32 %v548, %v576
        %v591 = vadd.f32 %v549, %v575
        %v592 = vadd.f32 %v550, %v576
        %v593 = vadd.f32 %v551, %v575
        %v594 = vadd.f32 %v552, %v576
        %v595 = vadd.f32 %v553, %v575
        %v596 = vadd.f32 %v554, %v576
        %v597 = vadd.f32 %v555, %v575
        %v598 = vadd.f32 %v556, %v576
        %v599 = vadd.f32 %v557, %v575
        %v600 = vadd.f32 %v558, %v576
        %v601 = vadd.f32 %v559, %v575
        %v602 = vadd.f32 %v560, %v576
        %v603 = vadd.f32 %v561, %v575
        %v604 = vadd.f32 %v562, %v576
        %v605 = vadd.f32 %v563, %v575
        %v606 = vadd.f32 %v564, %v576
        %v607 = vadd.f32 %v565, %v575
        %v608 = vadd.f32 %v566, %v576
        %v609 = vadd.f32 %v567, %v575
        %v610 = vadd.f32 %v568, %v576
        %v611 = vadd.f32 %v569, %v575
        %v612 = vadd.f32 %v570, %v576
        %v613 = vadd.f32 %v571, %v575
        %v614 = vadd.f32 %v572, %v576
        %615 = vst [vmem:[%s291] sm:$0xff] %v579
        %616 = vst [vmem:[%s291 + $0x8] sm:$0xff] %v580
        %617 = vst [vmem:[%s291 + $0x10] sm:$0xff] %v581
        %618 = vst [vmem:[%s291 + $0x18] sm:$0xff] %v582
        %619 = vst [vmem:[%s291 + $0x20] sm:$0xff] %v583
        %620 = vst [vmem:[%s291 + $0x28] sm:$0xff] %v584
        %621 = vst [vmem:[%s291 + $0x30] sm:$0xff] %v585
        %622 = vst [vmem:[%s291 + $0x38] sm:$0xff] %v586
        %623 = vst [vmem:[%s291 + $0x40] sm:$0xff] %v587
        %624 = vst [vmem:[%s291 + $0x48] sm:$0xff] %v588
        %625 = vst [vmem:[%s291 + $0x50] sm:$0xff] %v589
        %626 = vst [vmem:[%s291 + $0x58] sm:$0xff] %v590
        %627 = vst [vmem:[%s291 + $0x60] sm:$0xff] %v591
        %628 = vst [vmem:[%s291 + $0x68] sm:$0xff] %v592
        %629 = vst [vmem:[%s291 + $0x70] sm:$0xff] %v593
        %630 = vst [vmem:[%s291 + $0x78] sm:$0xff] %v594
        %631 = vst [vmem:[%s291 + $0x80] sm:$0xff] %v595
        %632 = vst [vmem:[%s291 + $0x88] sm:$0xff] %v596
        %633 = vst [vmem:[%s291 + $0x90] sm:$0xff] %v597
        %634 = vst [vmem:[%s291 + $0x98] sm:$0xff] %v598
        %635 = vst [vmem:[%s291 + $0xa0] sm:$0xff] %v599
        %636 = vst [vmem:[%s291 + $0xa8] sm:$0xff] %v600
        %637 = vst [vmem:[%s291 + $0xb0] sm:$0xff] %v601
        %638 = vst [vmem:[%s291 + $0xb8] sm:$0xff] %v602
        %639 = vst [vmem:[%s291 + $0xc0] sm:$0xff] %v603
        %640 = vst [vmem:[%s291 + $0xc8] sm:$0xff] %v604
        %641 = vst [vmem:[%s291 + $0xd0] sm:$0xff] %v605
        %642 = vst [vmem:[%s291 + $0xd8] sm:$0xff] %v606
        %643 = vst [vmem:[%s291 + $0xe0] sm:$0xff] %v607
        %644 = vst [vmem:[%s291 + $0xe8] sm:$0xff] %v608
        %645 = vst [vmem:[%s291 + $0xf0] sm:$0xff] %v609
        %646 = vst [vmem:[%s291 + $0xf8] sm:$0xff] %v610
        %647 = vst [vmem:[%s291 + $0x100] sm:$0xff] %v611
        %648 = vst [vmem:[%s291 + $0x108] sm:$0xff] %v612
        %649 = vst [vmem:[%s291 + $0x110] sm:$0xff] %v613
        %650 = vst [vmem:[%s291 + $0x118] sm:$0xff] %v614
        %s651 = sand.u32 %s126, 1
        %s652 = scalar_lea.sflag [#allocation4], %s651
        %s653 = sand.u32 %s126, 1
        %s654 = smul.addr %s653, 288
        %s655 = scalar_lea.vmem [#allocation8], %s654
        // Predicated region
        $region49: #{tpu_custom_call.1} parent=35 // pred_check
          %p656 = pneg %p136
        $region50: #{tpu_custom_call.1} parent=35 // pred_check_branch
          %658 = sbr.rel (%p656) target = $region52
        $region51: #{tpu_custom_call.1} parent=35 // pred_region
          %s659 = smul.u32 18, %s24
          %s660 = ssub.s32 75, %s659
          %p661 = scmp.lt.s32.totalorder %s660, 18
          %s662 = scalar_select %p661, %s660, 18
          %s663 = smul.u32 8, %s662
          %s664 = smul.u32 %s663, 2
          %s665 = ssub.s32 288, %s664
          %s666 = sshll.u32 %s665, 4
          %667 = vsyncadd %s652, %s666
          %p668 = scmp.ne.s32.totalorder 0, %s664
          %s669 = smul.addr %s659, 2
          %s670 = smul.addr %s669, 8
          %s671 = scalar_lea.hbm %s4, %s670
          %s672 = smul.u32 16, %s662
          %s673 = sshll.u32 %s655, 4
          %s674 = int_to_ptr.vmem [resolvable:$true] %s673
          %s675 = sshll.u32 %s671, 4
          %s676 = int_to_ptr.hbm [resolvable:$true] %s675
          %s677 = sshll.u32 %s672, 4
          %681 = dma.vmem_to_hbm [thread:$0]  (%p668), %s674, %s677, %s676, %s652, 256, 256, 16
        $region52: #{tpu_custom_call.1} parent=35 // pred_fallthru
          _
      $region36: #{tpu_custom_call.1} parent=5 // pred_fallthru
        _
      %p682 = scmp.le.s32.totalorder 2, %s19
      // Predicated region
      $region53: #{tpu_custom_call.1} parent=5 // pred_check
        %p683 = pneg %p682
      $region54: #{tpu_custom_call.1} parent=5 // pred_check_branch
        %685 = sbr.rel (%p683) target = $region56
      $region55: #{tpu_custom_call.1} parent=5 // pred_region
        %s686 = ssub.s32 %s19, 2
        // Predicated region
        $region57: #{tpu_custom_call.1} parent=55 // pred_check
          %p687 = pneg %p142
        $region58: #{tpu_custom_call.1} parent=55 // pred_check_branch
          %689 = sbr.rel (%p687) target = $region60
        $region59: #{tpu_custom_call.1} parent=55 // pred_region
          %s690 = sand.u32 %s127, 1
          %s691 = scalar_lea.sflag [#allocation4], %s690
          %s692 = sand.u32 %s127, 1
          %s693 = smul.addr %s692, 288
          %s694 = scalar_lea.vmem [#allocation8], %s693
          %696 = dma.done %s691, 4608
        $region60: #{tpu_custom_call.1} parent=55 // pred_fallthru
          _
      $region56: #{tpu_custom_call.1} parent=5 // pred_fallthru
        _
    $region6: #{tpu_custom_call.1} parent=1 // loop_footer
      %s23 = sadd.s32 1, %s19
    $region7: #{tpu_custom_call.1} parent=1 // loop_footer_branch
      %18 = sbr.rel target = $region3
    $region8: #{tpu_custom_call.1} parent=1 // loop_exit
      _
    %697 = vsyncpa [#allocation3], 1
    %s698 = scalar_lea.sflag [#allocation3], 1
    %699 = vsyncpa %s698, 1
    %700 = vsyncpa [#allocation6], 1
    %s701 = scalar_lea.sflag [#allocation6], 1
    %702 = vsyncpa %s701, 1
    %703 = vsyncpa [#allocation4], 1
    %s704 = scalar_lea.sflag [#allocation4], 1
    %705 = vsyncpa %s704, 1

</llo_original>
